<compile_context>
chip_gen: v6e
topology: v6e:2x2x1
jax: 0.10.0
libtpu: 0.0.40
codegen_flags: <defaults>
</compile_context>

<pallas_src>
import functools
import math

import jax
import jax.numpy as jnp
from jax.experimental import pallas as pl
from jax.experimental.pallas import tpu as pltpu

LAMBDA_GP = 10.0


def _round_up(x, m):
    return ((x + m - 1) // m) * m


def _vmem_capacity_bytes():
    """Physical VMEM per core; conservative 64 MiB (v7x) fallback if the query fails."""
    try:
        cap = int(getattr(pltpu.get_tpu_info(), "vmem_capacity_bytes", 0))
        if cap > 0:
            return cap
    except Exception:
        pass
    return 64 * 1024 * 1024


def _pick_tile_b(batch, feat, hidden, resident_bytes, vmem_limit):
    """Largest multiple-of-16 batch tile whose double-buffered streams plus in-kernel
    f32 temporaries fit the scoped VMEM limit alongside the resident weights."""
    hp = _round_up(max(hidden, 128), 128)       # lane-padded hidden width
    per_row = (
        2 * 2 * (feat * 2)      # real + fake bf16 streams, double-buffered
        + 2 * (128 * 4)         # alpha block (lane-padded to 128), double-buffered
        + 4 * (feat * 4)        # f32 temps: upcast real/fake, (real-fake), interp
        + 4 * (hp * 4)          # f32 temps: h, relu mask, mask@Gt, elementwise product
        + 3 * (128 * 4)         # sq / gnorm / penalty (lane-padded)
    )
    budget = vmem_limit - resident_bytes - (2 << 20)   # 2 MiB slack for misc scratch
    cap = max(budget // per_row, 16)
    tb = min(int(cap), _round_up(batch, 16), 8192)
    tb = max((tb // 16) * 16, 16)
    return tb


def _gp_kernel(alpha_ref, real_ref, fake_ref, w1_ref, b1_ref, g_ref,
               out_ref, acc_ref, *, batch_size, tile_b, needs_mask):
    c = pl.program_id(0)            # core-split axis ("parallel")
    i = pl.program_id(1)            # batch-tile axis ("arbitrary", carries accumulator)

    @pl.when(i == 0)
    def _():
        acc_ref[...] = jnp.zeros_like(acc_ref)

    alpha = alpha_ref[...]                                   # (TB, 1)  f32
    real = real_ref[...].astype(jnp.float32)                 # (TB, D)  bf16 -> f32
    fake = fake_ref[...].astype(jnp.float32)                 # (TB, D)

    # interpolated = alpha*real + (1-alpha)*fake  (one fewer multiply per element).
    interp = fake + alpha * (real - fake)                    # (TB, D) f32

    # Hidden pre-activation of D(x) = relu(x @ W1 + b1) @ w2^T.
    h = jnp.dot(interp.astype(w1_ref.dtype), w1_ref[...],
                preferred_element_type=jnp.float32) + b1_ref[...]        # (TB, H)

    # VJP of D wrt x with cotangent 1: grad_x = (relu'(h) * w2) @ W1^T.
    # Only ||grad_x||^2 is needed; with Gt = (W1*w2)^T (W1*w2) precomputed once,
    # ||grad_x||^2 = rowsum((m @ Gt) * m) where m = relu'(h) in {0,1}.
    m = (h > 0.0).astype(jnp.float32)                                    # (TB, H)
    mg = jnp.dot(m.astype(g_ref.dtype), g_ref[...],
                 preferred_element_type=jnp.float32)                     # (TB, H)
    sq = jnp.sum(mg * m, axis=1, keepdims=True)                          # (TB, 1)

    gnorm = jnp.sqrt(sq)                                                 # (TB, 1)
    pen = (gnorm - 1.0) ** 2                                             # (TB, 1)

    if needs_mask:
        # Zero-padded remainder rows still produce h = b1 (non-zero penalty): mask them.
        row0 = (c * pl.num_programs(1) + i) * tile_b
        rows = jax.lax.broadcasted_iota(jnp.int32, pen.shape, 0)
        pen = jnp.where(row0 + rows < batch_size, pen, 0.0)

    # Scalar per-tile accumulate; the reduce is tiny vs. the (TB, D) HBM stream per step.
    acc_ref[...] += jnp.sum(pen, keepdims=True)

    @pl.when(i == pl.num_programs(1) - 1)
    def _():
        out_ref[...] = acc_ref[...]


def gradient_penalty_loss(real_nchw, fake_nchw, alpha, w1, b1, w2):
    """real/fake: (B,C,H,W); alpha: (B,1,1,1); w1: (D,Hd); b1,w2: (1,Hd). Returns scalar."""
    B = real_nchw.shape[0]
    D = math.prod(real_nchw.shape[1:])
    Hd = w1.shape[-1]

    # Stream real/fake in bf16 (~2x less HBM traffic; kernel is bandwidth bound).
    real = real_nchw.reshape(B, D).astype(jnp.bfloat16)
    fake = fake_nchw.reshape(B, D).astype(jnp.bfloat16)
    alpha2d = alpha.reshape(B, 1).astype(jnp.float32)

    w1f = w1.astype(jnp.float32)
    b1f = b1.reshape(1, Hd).astype(jnp.float32)
    w2f = w2.reshape(1, Hd).astype(jnp.float32)
    # w2 folded into the Gram matrix (weight-only, once per call): Gt = (W1*w2)^T (W1*w2).
    w1w2 = w1f * w2f
    gtilde = jnp.dot(w1w2.T, w1w2, preferred_element_type=jnp.float32)   # (Hd, Hd)

    # Generation-aware scoped VMEM limit (~96 MiB on 128-MiB v5e/v6e, ~48 MiB on v7x).
    vmem_cap = _vmem_capacity_bytes()
    vmem_limit = max(min(vmem_cap * 3 // 4, vmem_cap - (8 << 20)), 32 << 20)

    # Keep resident weights in bf16 if their f32 footprint would crowd out streamed
    # tiles (mainly a v7x / 64-MiB concern); MXU accumulation stays f32 either way.
    resident_f32 = 2 * (D * Hd + Hd * Hd) * 4
    if resident_f32 > vmem_limit // 4:
        w1_res, g_res = w1f.astype(jnp.bfloat16), gtilde.astype(jnp.bfloat16)
    else:
        w1_res, g_res = w1f, gtilde
    resident_bytes = 2 * (w1_res.size * w1_res.dtype.itemsize
                          + g_res.size * g_res.dtype.itemsize
                          + 8 * _round_up(Hd, 128) * 4)

    tb = _pick_tile_b(B, D, Hd, resident_bytes, vmem_limit)
    total_tiles = -(-B // tb)
    # Leading "parallel" axis feeds both v7x TensorCores; serial (and ~free) on v5e/v6e.
    ncore = min(2, total_tiles)
    tpc = -(-total_tiles // ncore)                 # tiles per core
    padded_b = ncore * tpc * tb
    needs_mask = padded_b != B
    if needs_mask:
        pad = padded_b - B
        real = jnp.pad(real, ((0, pad), (0, 0)))
        fake = jnp.pad(fake, ((0, pad), (0, 0)))
        alpha2d = jnp.pad(alpha2d, ((0, pad), (0, 0)))

    kernel = functools.partial(_gp_kernel, batch_size=B, tile_b=tb, needs_mask=needs_mask)
    partials = pl.pallas_call(
        kernel,
        out_shape=jax.ShapeDtypeStruct((ncore, 1, 1), jnp.float32),
        grid_spec=pltpu.PrefetchScalarGridSpec(
            num_scalar_prefetch=0,
            grid=(ncore, tpc),
            in_specs=[
                pl.BlockSpec((tb, 1), lambda c, i: (c * tpc + i, 0)),   # alpha (streamed)
                pl.BlockSpec((tb, D), lambda c, i: (c * tpc + i, 0)),   # real  (streamed bf16)
                pl.BlockSpec((tb, D), lambda c, i: (c * tpc + i, 0)),   # fake  (streamed bf16)
                pl.BlockSpec((D, Hd), lambda c, i: (0, 0)),             # W1    (resident)
                pl.BlockSpec((1, Hd), lambda c, i: (0, 0)),             # b1    (resident)
                pl.BlockSpec((Hd, Hd), lambda c, i: (0, 0)),            # Gt    (resident)
            ],
            out_specs=pl.BlockSpec((None, 1, 1), lambda c, i: (c, 0, 0)),
            scratch_shapes=[pltpu.VMEM((1, 1), jnp.float32)],
        ),
        compiler_params=pltpu.CompilerParams(
            dimension_semantics=("parallel", "arbitrary"),
            vmem_limit_bytes=int(vmem_limit),
        ),
    )(alpha2d, real, fake, w1_res, b1f, g_res)
    return (LAMBDA_GP / B) * jnp.sum(partials)


def _reference(real_nchw, fake_nchw, alpha, w1, b1, w2):
    """Pure-JAX autodiff reference (mirrors torch.autograd.grad). real/fake are rounded
    to bf16 first to mirror the kernel's bf16 streaming precision."""
    B = real_nchw.shape[0]
    real = real_nchw.reshape(B, -1).astype(jnp.bfloat16).astype(jnp.float32)
    fake = fake_nchw.reshape(B, -1).astype(jnp.bfloat16).astype(jnp.float32)
    a = alpha.reshape(B, 1)

    def disc(x):
        h = jnp.maximum(x @ w1 + b1, 0.0)
        return h @ w2.T  # (B, 1)

    interp = a * real + (1.0 - a) * fake
    d, vjp = jax.vjp(disc, interp)
    (g,) = vjp(jnp.ones_like(d))
    gnorm = jnp.sqrt(jnp.sum(g * g, axis=1))
    return LAMBDA_GP * jnp.mean((gnorm - 1.0) ** 2)


if __name__ == "__main__":
    key = jax.random.PRNGKey(0)
    k_real, k_fake, k_alpha, k_w1, k_w2, k_b1 = jax.random.split(key, 6)

    B, C, H, W = 2, 4, 16, 16
    Din = C * H * W
    HID = 32

    real_samples = jax.random.normal(k_real, (B, C, H, W), jnp.float32)
    fake_samples = jax.random.normal(k_fake, (B, C, H, W), jnp.float32)
    # alpha ~ U[0,1): matches torch.rand(batch_size, 1, 1, 1) drawn inside the module.
    alpha = jax.random.uniform(k_alpha, (B, 1, 1, 1), jnp.float32)

    # Deterministic synthetic discriminator parameters (2-layer ReLU MLP).
    w1 = jax.random.normal(k_w1, (Din, HID), jnp.float32) * 0.05
    b1 = jax.random.normal(k_b1, (1, HID), jnp.float32) * 0.05
    w2 = jax.random.normal(k_w2, (1, HID), jnp.float32) * 0.05

    loss = gradient_penalty_loss(real_samples, fake_samples, alpha, w1, b1, w2)
    loss = jax.block_until_ready(loss)

    ref = jax.block_until_ready(_reference(real_samples, fake_samples, alpha, w1, b1, w2))
    # Gram-matrix reassociation differs from direct sum-of-squares at ~1e-6 relative.
    assert jnp.allclose(loss, ref, rtol=5e-4, atol=1e-5), (loss, ref)

    print("KERNEL_OK")
</pallas_src>

<mosaic_0001>
module attributes {stable_mosaic.version = 11 : i64} {
  func.func @_gp_kernel(%arg0: i32, %arg1: i32, %arg2: memref<16x1xf32, #tpu.memory_space<vmem>>, %arg3: memref<16x1024xbf16, #tpu.memory_space<vmem>>, %arg4: memref<16x1024xbf16, #tpu.memory_space<vmem>>, %arg5: memref<1024x32xf32, #tpu.memory_space<vmem>>, %arg6: memref<1x32xf32, #tpu.memory_space<vmem>>, %arg7: memref<32x32xf32, #tpu.memory_space<vmem>>, %arg8: memref<1x1x1xf32, #tpu.memory_space<vmem>>, %arg9: memref<1x1xf32, #tpu.memory_space<vmem>>) attributes {dimension_semantics = [#tpu.dimension_semantics<parallel>, #tpu.dimension_semantics<arbitrary>], iteration_bounds = array<i64: 1, 1>, scalar_prefetch = 0 : i64, scratch_operands = 1 : i64, tpu.core_type = #tpu.core_type<tc>, window_params = [{transform_indices = @transform_0, window_bounds = array<i64: 16, 1>}, {transform_indices = @transform_1, window_bounds = array<i64: 16, 1024>}, {transform_indices = @transform_2, window_bounds = array<i64: 16, 1024>}, {pipeline_mode = #tpu.pipeline_mode<synchronous>, transform_indices = @transform_3, window_bounds = array<i64: 1024, 32>}, {pipeline_mode = #tpu.pipeline_mode<synchronous>, transform_indices = @transform_4, window_bounds = array<i64: 1, 32>}, {pipeline_mode = #tpu.pipeline_mode<synchronous>, transform_indices = @transform_5, window_bounds = array<i64: 32, 32>}, {transform_indices = @transform_6, window_bounds = array<i64: 1, 1, 1>}]} {
    %c0_i32 = arith.constant 0 : i32
    %0 = arith.cmpi eq, %arg1, %c0_i32 : i32
    %1 = arith.extui %0 : i1 to i32
    %c0_i32_0 = arith.constant 0 : i32
    %2 = arith.cmpi ne, %1, %c0_i32_0 : i32
    scf.if %2 {
      %cst_24 = arith.constant 0.000000e+00 : f32
      %51 = vector.broadcast %cst_24 : f32 to vector<1x1xf32>
      %c0_25 = arith.constant 0 : index
      %c0_26 = arith.constant 0 : index
      %52 = vector.load %arg9[%c0_25, %c0_26] : memref<1x1xf32, #tpu.memory_space<vmem>>, vector<1x1xf32>
      tpu.vector_store %arg9[%c0_25, %c0_26], %51 {strides = array<i32>} : memref<1x1xf32, #tpu.memory_space<vmem>>, vector<1x1xf32>,
    } else {
    }
    %c0 = arith.constant 0 : index
    %c0_1 = arith.constant 0 : index
    %3 = vector.load %arg2[%c0, %c0_1] : memref<16x1xf32, #tpu.memory_space<vmem>>, vector<16x1xf32>
    %c0_2 = arith.constant 0 : index
    %c0_3 = arith.constant 0 : index
    %4 = vector.load %arg3[%c0_2, %c0_3] : memref<16x1024xbf16, #tpu.memory_space<vmem>>, vector<16x1024xbf16>
    %5 = arith.extf %4 : vector<16x1024xbf16> to vector<16x1024xf32>
    %c0_4 = arith.constant 0 : index
    %c0_5 = arith.constant 0 : index
    %6 = vector.load %arg4[%c0_4, %c0_5] : memref<16x1024xbf16, #tpu.memory_space<vmem>>, vector<16x1024xbf16>
    %7 = arith.extf %6 : vector<16x1024xbf16> to vector<16x1024xf32>
    %8 = arith.subf %5, %7 : vector<16x1024xf32>
    %9 = vector.broadcast %3 : vector<16x1xf32> to vector<16x1024xf32>
    %10 = arith.mulf %9, %8 : vector<16x1024xf32>
    %11 = arith.addf %7, %10 : vector<16x1024xf32>
    %c0_6 = arith.constant 0 : index
    %c0_7 = arith.constant 0 : index
    %12 = vector.load %arg5[%c0_6, %c0_7] : memref<1024x32xf32, #tpu.memory_space<vmem>>, vector<1024x32xf32>
    %cst = arith.constant dense<0.000000e+00> : vector<16x32xf32>
    %13 = tpu.matmul %11, %12, %cst {dimension_numbers = #tpu.dot_dimension_numbers<[1], [0], [0], [1], [0, 0, 1, 1], [], []>} : vector<16x1024xf32>, vector<1024x32xf32>, vector<16x32xf32> -> vector<16x32xf32>
    %c0_8 = arith.constant 0 : index
    %c0_9 = arith.constant 0 : index
    %14 = vector.load %arg6[%c0_8, %c0_9] : memref<1x32xf32, #tpu.memory_space<vmem>>, vector<1x32xf32>
    %15 = vector.broadcast %14 : vector<1x32xf32> to vector<16x32xf32>
    %16 = arith.addf %13, %15 : vector<16x32xf32>
    %cst_10 = arith.constant 0.000000e+00 : f32
    %17 = vector.broadcast %cst_10 : f32 to vector<16x32xf32>
    %18 = arith.cmpf ogt, %16, %17 : vector<16x32xf32>
    %19 = arith.extui %18 : vector<16x32xi1> to vector<16x32xi32>
    %20 = arith.sitofp %19 : vector<16x32xi32> to vector<16x32xf32>
    %c0_11 = arith.constant 0 : index
    %c0_12 = arith.constant 0 : index
    %21 = vector.load %arg7[%c0_11, %c0_12] : memref<32x32xf32, #tpu.memory_space<vmem>>, vector<32x32xf32>
    %cst_13 = arith.constant dense<0.000000e+00> : vector<16x32xf32>
    %22 = tpu.matmul %20, %21, %cst_13 {dimension_numbers = #tpu.dot_dimension_numbers<[1], [0], [0], [1], [0, 0, 1, 1], [], []>} : vector<16x32xf32>, vector<32x32xf32>, vector<16x32xf32> -> vector<16x32xf32>
    %23 = arith.mulf %22, %20 : vector<16x32xf32>
    %cst_14 = arith.constant dense<0.000000e+00> : vector<16xf32>
    %24 = vector.multi_reduction <add>, %23, %cst_14 [1] : vector<16x32xf32> to vector<16xf32>
    %25 = vector.shape_cast %24 : vector<16xf32> to vector<16x1xf32>
    %26 = math.sqrt %25 : vector<16x1xf32>
    %cst_15 = arith.constant 1.000000e+00 : f32
    %27 = vector.broadcast %cst_15 : f32 to vector<16x1xf32>
    %28 = arith.subf %26, %27 : vector<16x1xf32>
    %29 = arith.mulf %28, %28 : vector<16x1xf32>
    %c1_i32 = arith.constant 1 : i32
    %30 = arith.muli %arg0, %c1_i32 : i32
    %31 = arith.addi %30, %arg1 : i32
    %c16_i32 = arith.constant 16 : i32
    %32 = arith.muli %31, %c16_i32 : i32
    %33 = tpu.iota {dimensions = array<i32: 0>} : vector<16x1xi32>
    %34 = vector.broadcast %32 : i32 to vector<16x1xi32>
    %35 = arith.addi %34, %33 : vector<16x1xi32>
    %c2_i32 = arith.constant 2 : i32
    %36 = vector.broadcast %c2_i32 : i32 to vector<16x1xi32>
    %37 = arith.cmpi slt, %35, %36 : vector<16x1xi32>
    %cst_16 = arith.constant 0.000000e+00 : f32
    %38 = vector.broadcast %cst_16 : f32 to vector<16x1xf32>
    %39 = arith.select %37, %29, %38 : vector<16x1xi1>, vector<16x1xf32>
    %c0_17 = arith.constant 0 : index
    %c0_18 = arith.constant 0 : index
    %40 = vector.load %arg9[%c0_17, %c0_18] : memref<1x1xf32, #tpu.memory_space<vmem>>, vector<1x1xf32>
    %41 = vector.shape_cast %39 : vector<16x1xf32> to vector<1x16x1xf32>
    %cst_19 = arith.constant dense<0.000000e+00> : vector<1xf32>
    %42 = vector.multi_reduction <add>, %41, %cst_19 [1, 2] : vector<1x16x1xf32> to vector<1xf32>
    %43 = vector.shape_cast %42 : vector<1xf32> to vector<1x1x1xf32>
    %44 = vector.extract %43[0, 0, 0] : f32 from vector<1x1x1xf32>
    %45 = vector.broadcast %44 : f32 to vector<1x1xf32>
    %46 = arith.addf %40, %45 : vector<1x1xf32>
    %c0_20 = arith.constant 0 : index
    %c0_21 = arith.constant 0 : index
    %47 = vector.load %arg9[%c0_20, %c0_21] : memref<1x1xf32, #tpu.memory_space<vmem>>, vector<1x1xf32>
    tpu.vector_store %arg9[%c0_20, %c0_21], %46 {strides = array<i32>} : memref<1x1xf32, #tpu.memory_space<vmem>>, vector<1x1xf32>,
    %c0_i32_22 = arith.constant 0 : i32
    %48 = arith.cmpi eq, %arg1, %c0_i32_22 : i32
    %49 = arith.extui %48 : i1 to i32
    %c0_i32_23 = arith.constant 0 : i32
    %50 = arith.cmpi ne, %49, %c0_i32_23 : i32
    scf.if %50 {
      %c0_24 = arith.constant 0 : index
      %c0_25 = arith.constant 0 : index
      %51 = vector.load %arg9[%c0_24, %c0_25] : memref<1x1xf32, #tpu.memory_space<vmem>>, vector<1x1xf32>
      %c0_26 = arith.constant 0 : index
      %c0_27 = arith.constant 0 : index
      %c0_28 = arith.constant 0 : index
      %52 = vector.load %arg8[%c0_26, %c0_27, %c0_28] : memref<1x1x1xf32, #tpu.memory_space<vmem>>, vector<1x1x1xf32>
      %53 = vector.shape_cast %52 : vector<1x1x1xf32> to vector<1x1xf32>
      %54 = vector.shape_cast %51 : vector<1x1xf32> to vector<1x1x1xf32>
      tpu.vector_store %arg8[%c0_26, %c0_27, %c0_28], %54 {strides = array<i32>} : memref<1x1x1xf32, #tpu.memory_space<vmem>>, vector<1x1x1xf32>,
    } else {
    }
    return
  }
  func.func @transform_0(%arg0: i32, %arg1: i32) -> (i32, i32) {
    %c1_i32 = arith.constant 1 : i32
    %0 = arith.muli %arg0, %c1_i32 : i32
    %1 = arith.addi %0, %arg1 : i32
    %c0_i32 = arith.constant 0 : i32
    %c0_i32_0 = arith.constant 0 : i32
    return %1, %c0_i32 : i32, i32
  }
  func.func @transform_1(%arg0: i32, %arg1: i32) -> (i32, i32) {
    %c1_i32 = arith.constant 1 : i32
    %0 = arith.muli %arg0, %c1_i32 : i32
    %1 = arith.addi %0, %arg1 : i32
    %c0_i32 = arith.constant 0 : i32
    %c0_i32_0 = arith.constant 0 : i32
    return %1, %c0_i32 : i32, i32
  }
  func.func @transform_2(%arg0: i32, %arg1: i32) -> (i32, i32) {
    %c1_i32 = arith.constant 1 : i32
    %0 = arith.muli %arg0, %c1_i32 : i32
    %1 = arith.addi %0, %arg1 : i32
    %c0_i32 = arith.constant 0 : i32
    %c0_i32_0 = arith.constant 0 : i32
    return %1, %c0_i32 : i32, i32
  }
  func.func @transform_3(%arg0: i32, %arg1: i32) -> (i32, i32) {
    %c0_i32 = arith.constant 0 : i32
    %c0_i32_0 = arith.constant 0 : i32
    %c0_i32_1 = arith.constant 0 : i32
    return %c0_i32, %c0_i32_0 : i32, i32
  }
  func.func @transform_4(%arg0: i32, %arg1: i32) -> (i32, i32) {
    %c0_i32 = arith.constant 0 : i32
    %c0_i32_0 = arith.constant 0 : i32
    %c0_i32_1 = arith.constant 0 : i32
    return %c0_i32, %c0_i32_0 : i32, i32
  }
  func.func @transform_5(%arg0: i32, %arg1: i32) -> (i32, i32) {
    %c0_i32 = arith.constant 0 : i32
    %c0_i32_0 = arith.constant 0 : i32
    %c0_i32_1 = arith.constant 0 : i32
    return %c0_i32, %c0_i32_0 : i32, i32
  }
  func.func @transform_6(%arg0: i32, %arg1: i32) -> (i32, i32, i32) {
    %c0_i32 = arith.constant 0 : i32
    %c0_i32_0 = arith.constant 0 : i32
    %c0_i32_1 = arith.constant 0 : i32
    return %arg0, %c0_i32, %c0_i32_0 : i32, i32, i32
  }
}

</mosaic_0001>

<llo_original>
// kernel: tpu_custom_call.1
$region0: #{tpu_custom_call.1}
  #allocation0 [shape = 'u32[]', space=smem, size = 0x4, offset = 0x4, fixed_abs, tag = 'smem constant byte address 0x4 - core index']
  #allocation1 [shape = 'u32[144,128]{1,0:T(1,128)}', space=vmem, size = 0x12000, scoped, tag = 'internal scratch']
  #allocation2 [shape = 'f32[1,1]{1,0:T(1,128)}', space=vmem, size = 0x200, scoped, tag = 'scratch operand']
  %s0 = inlined_call_operand.vmem [shape: f32[16,1], index: 0, kind: input, shape index: {}]
  %s1 = inlined_call_operand.vmem [shape: bf16[16,1024], index: 1, kind: input, shape index: {}]
  %s2 = inlined_call_operand.vmem [shape: bf16[16,1024], index: 2, kind: input, shape index: {}]
  %s3 = inlined_call_operand.vmem [shape: f32[1024,32], index: 3, kind: input, shape index: {}]
  %s4 = inlined_call_operand.vmem [shape: f32[1,32], index: 4, kind: input, shape index: {}]
  %s5 = inlined_call_operand.vmem [shape: f32[32,32], index: 5, kind: input, shape index: {}]
  %s6 = inlined_call_operand.hbm [shape: f32[1,1,1], index: 6, kind: output, shape index: {}]
  %s7 = sld [smem:[#allocation0]]
  $region42: #{tpu_custom_call.1} parent=0
    _
  %s9 = ssub.s32 1, %s7
  %s10 = scalar_select 0, %s9, %s7
  $region1: #{tpu_custom_call.1} parent=0
    #allocation3 [shape = 'u8[512]{0}', space=vmem, size = 0x400, scoped, tag = 'output window, operand 0, single buffered']
    #allocation4 [shape = 's32[1]{0}', space=sflag, size = 0x4, scoped, tag = 'scoped memory for tpu_custom_call.1']
    %11 = vsyncpa [#allocation4], 0
    // Predicated region
    $region2: #{tpu_custom_call.1} parent=1 // pred_check
      _
    $region3: #{tpu_custom_call.1} parent=1 // pred_check_branch
      %13 = sbr.rel (0) target = $region5
    $region4: #{tpu_custom_call.1} parent=1 // pred_region
      %s14 = sadd.s32 0, 0
      %s15 = smul.u32 2, %s14
      %p16 = scmp.lt.s32.totalorder %s15, 1
      %s17 = scalar_select %p16, %s15, 1
      %s18 = smul.addr %s17, 8
      %s19 = scalar_lea.vmem %s0, %s18
      %s20 = sadd.s32 0, 0
      %s21 = smul.u32 2, %s20
    $region5: #{tpu_custom_call.1} parent=1 // pred_fallthru
      _
    // Predicated region
    $region6: #{tpu_custom_call.1} parent=1 // pred_check
      _
    $region7: #{tpu_custom_call.1} parent=1 // pred_check_branch
      %23 = sbr.rel (0) target = $region9
    $region8: #{tpu_custom_call.1} parent=1 // pred_region
      %s24 = sadd.s32 0, 0
      %s25 = smul.u32 2, %s24
      %p26 = scmp.lt.s32.totalorder %s25, 1
      %s27 = scalar_select %p26, %s25, 1
      %s28 = smul.addr %s27, 8
      %s29 = smul.addr %s28, 4
      %s30 = scalar_lea.vmem %s1, %s29
      %s31 = sadd.s32 0, 0
      %s32 = smul.u32 2, %s31
    $region9: #{tpu_custom_call.1} parent=1 // pred_fallthru
      _
    // Predicated region
    $region10: #{tpu_custom_call.1} parent=1 // pred_check
      _
    $region11: #{tpu_custom_call.1} parent=1 // pred_check_branch
      %34 = sbr.rel (0) target = $region13
    $region12: #{tpu_custom_call.1} parent=1 // pred_region
      %s35 = sadd.s32 0, 0
      %s36 = smul.u32 2, %s35
      %p37 = scmp.lt.s32.totalorder %s36, 1
      %s38 = scalar_select %p37, %s36, 1
      %s39 = smul.addr %s38, 8
      %s40 = smul.addr %s39, 4
      %s41 = scalar_lea.vmem %s2, %s40
      %s42 = sadd.s32 0, 0
      %s43 = smul.u32 2, %s42
    $region13: #{tpu_custom_call.1} parent=1 // pred_fallthru
      _
    // Predicated region
    $region14: #{tpu_custom_call.1} parent=1 // pred_check
      _
    $region15: #{tpu_custom_call.1} parent=1 // pred_check_branch
      %45 = sbr.rel (0) target = $region17
    $region16: #{tpu_custom_call.1} parent=1 // pred_region
      _
    $region17: #{tpu_custom_call.1} parent=1 // pred_fallthru
      _
    // Predicated region
    $region18: #{tpu_custom_call.1} parent=1 // pred_check
      _
    $region19: #{tpu_custom_call.1} parent=1 // pred_check_branch
      %47 = sbr.rel (0) target = $region21
    $region20: #{tpu_custom_call.1} parent=1 // pred_region
      _
    $region21: #{tpu_custom_call.1} parent=1 // pred_fallthru
      _
    // Predicated region
    $region22: #{tpu_custom_call.1} parent=1 // pred_check
      _
    $region23: #{tpu_custom_call.1} parent=1 // pred_check_branch
      %49 = sbr.rel (0) target = $region25
    $region24: #{tpu_custom_call.1} parent=1 // pred_region
      _
    $region25: #{tpu_custom_call.1} parent=1 // pred_fallthru
      _
    %s50 = sadd.s32 0, 0
    %s51 = smul.u32 2, %s50
    %p52 = scmp.lt.s32.totalorder %s51, 1
    %s53 = scalar_select %p52, %s51, 1
    %s54 = smul.addr %s53, 8
    %s55 = scalar_lea.vmem %s0, %s54
    %s56 = sadd.s32 0, 0
    %s57 = smul.u32 2, %s56
    %p58 = scmp.lt.s32.totalorder %s57, 1
    %s59 = scalar_select %p58, %s57, 1
    %s60 = smul.addr %s59, 8
    %s61 = smul.addr %s60, 4
    %s62 = scalar_lea.vmem %s1, %s61
    %s63 = sadd.s32 0, 0
    %s64 = smul.u32 2, %s63
    %p65 = scmp.lt.s32.totalorder %s64, 1
    %s66 = scalar_select %p65, %s64, 1
    %s67 = smul.addr %s66, 8
    %s68 = smul.addr %s67, 4
    %s69 = scalar_lea.vmem %s2, %s68
    %s70 = sadd.s32 0, 0
    %s71 = smul.u32 2, %s70
    %p72 = scmp.lt.s32.totalorder %s71, 1
    %s73 = scalar_select %p72, %s71, 1
    %s74 = smul.addr %s73, 8
    %s75 = scalar_lea.vmem %s0, %s74
    %s76 = sadd.s32 0, 0
    %s77 = smul.u32 2, %s76
    %s78 = sadd.s32 0, 0
    %s79 = smul.u32 2, %s78
    %p80 = scmp.lt.s32.totalorder %s79, 1
    %s81 = scalar_select %p80, %s79, 1
    %s82 = smul.addr %s81, 8
    %s83 = smul.addr %s82, 4
    %s84 = scalar_lea.vmem %s1, %s83
    %s85 = sadd.s32 0, 0
    %s86 = smul.u32 2, %s85
    %s87 = sadd.s32 0, 0
    %s88 = smul.u32 2, %s87
    %p89 = scmp.lt.s32.totalorder %s88, 1
    %s90 = scalar_select %p89, %s88, 1
    %s91 = smul.addr %s90, 8
    %s92 = smul.addr %s91, 4
    %s93 = scalar_lea.vmem %s2, %s92
    %s94 = sadd.s32 0, 0
    %s95 = smul.u32 2, %s94
    %p96 = scmp.eq.s32.totalorder 0, 0
    // Predicated region
    $region26: #{tpu_custom_call.1} parent=1 // pred_check
      %p97 = pneg %p96
    $region27: #{tpu_custom_call.1} parent=1 // pred_check_branch
      %99 = sbr.rel (%p97) target = $region29
    $region28: #{tpu_custom_call.1} parent=1 // pred_region
      %vm100 = vcmask 0
      %101 = vst.msk [vmem:[#allocation2] sm:$0x1] %vm100, 0.0
    $region29: #{tpu_custom_call.1} parent=1 // pred_fallthru
      _
    %v102 = vld [vmem:[%s75] sm:$0xff]
    %v103 = vld [vmem:[%s75 + $0x8] sm:$0xff]
    %v104 = vld [vmem:[%s84] sm:$0xff]
    %v105 = vld [vmem:[%s84 + $0x8] sm:$0xff]
    %v106 = vld [vmem:[%s84 + $0x10] sm:$0xff]
    %v107 = vld [vmem:[%s84 + $0x18] sm:$0xff]
    %v108 = vld [vmem:[%s84 + $0x20] sm:$0xff]
    %v109 = vld [vmem:[%s84 + $0x28] sm:$0xff]
    %v110 = vld [vmem:[%s84 + $0x30] sm:$0xff]
    %v111 = vld [vmem:[%s84 + $0x38] sm:$0xff]
    %v112 = vunpack.c.l.bf16 %v104
    %v113 = vunpack.c.h.bf16 %v104
    %v114 = vunpack.c.l.bf16 %v105
    %v115 = vunpack.c.h.bf16 %v105
    %v116 = vunpack.c.l.bf16 %v106
    %v117 = vunpack.c.h.bf16 %v106
    %v118 = vunpack.c.l.bf16 %v107
    %v119 = vunpack.c.h.bf16 %v107
    %v120 = vunpack.c.l.bf16 %v108
    %v121 = vunpack.c.h.bf16 %v108
    %v122 = vunpack.c.l.bf16 %v109
    %v123 = vunpack.c.h.bf16 %v109
    %v124 = vunpack.c.l.bf16 %v110
    %v125 = vunpack.c.h.bf16 %v110
    %v126 = vunpack.c.l.bf16 %v111
    %v127 = vunpack.c.h.bf16 %v111
    %v128 = vld [vmem:[%s93] sm:$0xff]
    %v129 = vld [vmem:[%s93 + $0x8] sm:$0xff]
    %v130 = vld [vmem:[%s93 + $0x10] sm:$0xff]
    %v131 = vld [vmem:[%s93 + $0x18] sm:$0xff]
    %v132 = vld [vmem:[%s93 + $0x20] sm:$0xff]
    %v133 = vld [vmem:[%s93 + $0x28] sm:$0xff]
    %v134 = vld [vmem:[%s93 + $0x30] sm:$0xff]
    %v135 = vld [vmem:[%s93 + $0x38] sm:$0xff]
    %v136 = vunpack.c.l.bf16 %v128
    %v137 = vunpack.c.h.bf16 %v128
    %v138 = vunpack.c.l.bf16 %v129
    %v139 = vunpack.c.h.bf16 %v129
    %v140 = vunpack.c.l.bf16 %v130
    %v141 = vunpack.c.h.bf16 %v130
    %v142 = vunpack.c.l.bf16 %v131
    %v143 = vunpack.c.h.bf16 %v131
    %v144 = vunpack.c.l.bf16 %v132
    %v145 = vunpack.c.h.bf16 %v132
    %v146 = vunpack.c.l.bf16 %v133
    %v147 = vunpack.c.h.bf16 %v133
    %v148 = vunpack.c.l.bf16 %v134
    %v149 = vunpack.c.h.bf16 %v134
    %v150 = vunpack.c.l.bf16 %v135
    %v151 = vunpack.c.h.bf16 %v135
    %v152 = vsub.f32 %v112, %v136
    %v153 = vsub.f32 %v113, %v137
    %v154 = vsub.f32 %v114, %v138
    %v155 = vsub.f32 %v115, %v139
    %v156 = vsub.f32 %v116, %v140
    %v157 = vsub.f32 %v117, %v141
    %v158 = vsub.f32 %v118, %v142
    %v159 = vsub.f32 %v119, %v143
    %v160 = vsub.f32 %v120, %v144
    %v161 = vsub.f32 %v121, %v145
    %v162 = vsub.f32 %v122, %v146
    %v163 = vsub.f32 %v123, %v147
    %v164 = vsub.f32 %v124, %v148
    %v165 = vsub.f32 %v125, %v149
    %v166 = vsub.f32 %v126, %v150
    %v167 = vsub.f32 %v127, %v151
    %169 = vset.pattern.permute.xlu0 0
    %170 = vperm.xlu0 %169, %v102
    %v171 = vpop.permute.xlu0 %170
    %174 = vset.pattern.permute.xlu0 0
    %175 = vperm.xlu0 %174, %v103
    %v176 = vpop.permute.xlu0 %175
    %v178 = vmul.f32 %v171, %v152
    %v179 = vmul.f32 %v171, %v153
    %v180 = vmul.f32 %v171, %v154
    %v181 = vmul.f32 %v171, %v155
    %v182 = vmul.f32 %v171, %v156
    %v183 = vmul.f32 %v171, %v157
    %v184 = vmul.f32 %v171, %v158
    %v185 = vmul.f32 %v171, %v159
    %v186 = vmul.f32 %v176, %v160
    %v187 = vmul.f32 %v176, %v161
    %v188 = vmul.f32 %v176, %v162
    %v189 = vmul.f32 %v176, %v163
    %v190 = vmul.f32 %v176, %v164
    %v191 = vmul.f32 %v176, %v165
    %v192 = vmul.f32 %v176, %v166
    %v193 = vmul.f32 %v176, %v167
    %v194 = vadd.f32 %v136, %v178
    %v195 = vadd.f32 %v137, %v179
    %v196 = vadd.f32 %v138, %v180
    %v197 = vadd.f32 %v139, %v181
    %v198 = vadd.f32 %v140, %v182
    %v199 = vadd.f32 %v141, %v183
    %v200 = vadd.f32 %v142, %v184
    %v201 = vadd.f32 %v143, %v185
    %v202 = vadd.f32 %v144, %v186
    %v203 = vadd.f32 %v145, %v187
    %v204 = vadd.f32 %v146, %v188
    %v205 = vadd.f32 %v147, %v189
    %v206 = vadd.f32 %v148, %v190
    %v207 = vadd.f32 %v149, %v191
    %v208 = vadd.f32 %v150, %v192
    %v209 = vadd.f32 %v151, %v193
    %v210 = vld [vmem:[%s3] sm:$0xff]
    %v211 = vld [vmem:[%s3 + $0x8] sm:$0xff]
    %v212 = vld [vmem:[%s3 + $0x10] sm:$0xff]
    %v213 = vld [vmem:[%s3 + $0x18] sm:$0xff]
    %v214 = vld [vmem:[%s3 + $0x20] sm:$0xff]
    %v215 = vld [vmem:[%s3 + $0x28] sm:$0xff]
    %v216 = vld [vmem:[%s3 + $0x30] sm:$0xff]
    %v217 = vld [vmem:[%s3 + $0x38] sm:$0xff]
    %v218 = vld [vmem:[%s3 + $0x40] sm:$0xff]
    %v219 = vld [vmem:[%s3 + $0x48] sm:$0xff]
    %v220 = vld [vmem:[%s3 + $0x50] sm:$0xff]
    %v221 = vld [vmem:[%s3 + $0x58] sm:$0xff]
    %v222 = vld [vmem:[%s3 + $0x60] sm:$0xff]
    %v223 = vld [vmem:[%s3 + $0x68] sm:$0xff]
    %v224 = vld [vmem:[%s3 + $0x70] sm:$0xff]
    %v225 = vld [vmem:[%s3 + $0x78] sm:$0xff]
    %v226 = vld [vmem:[%s3 + $0x80] sm:$0xff]
    %v227 = vld [vmem:[%s3 + $0x88] sm:$0xff]
    %v228 = vld [vmem:[%s3 + $0x90] sm:$0xff]
    %v229 = vld [vmem:[%s3 + $0x98] sm:$0xff]
    %v230 = vld [vmem:[%s3 + $0xa0] sm:$0xff]
    %v231 = vld [vmem:[%s3 + $0xa8] sm:$0xff]
    %v232 = vld [vmem:[%s3 + $0xb0] sm:$0xff]
    %v233 = vld [vmem:[%s3 + $0xb8] sm:$0xff]
    %v234 = vld [vmem:[%s3 + $0xc0] sm:$0xff]
    %v235 = vld [vmem:[%s3 + $0xc8] sm:$0xff]
    %v236 = vld [vmem:[%s3 + $0xd0] sm:$0xff]
    %v237 = vld [vmem:[%s3 + $0xd8] sm:$0xff]
    %v238 = vld [vmem:[%s3 + $0xe0] sm:$0xff]
    %v239 = vld [vmem:[%s3 + $0xe8] sm:$0xff]
    %v240 = vld [vmem:[%s3 + $0xf0] sm:$0xff]
    %v241 = vld [vmem:[%s3 + $0xf8] sm:$0xff]
    %v242 = vld [vmem:[%s3 + $0x100] sm:$0xff]
    %v243 = vld [vmem:[%s3 + $0x108] sm:$0xff]
    %v244 = vld [vmem:[%s3 + $0x110] sm:$0xff]
    %v245 = vld [vmem:[%s3 + $0x118] sm:$0xff]
    %v246 = vld [vmem:[%s3 + $0x120] sm:$0xff]
    %v247 = vld [vmem:[%s3 + $0x128] sm:$0xff]
    %v248 = vld [vmem:[%s3 + $0x130] sm:$0xff]
    %v249 = vld [vmem:[%s3 + $0x138] sm:$0xff]
    %v250 = vld [vmem:[%s3 + $0x140] sm:$0xff]
    %v251 = vld [vmem:[%s3 + $0x148] sm:$0xff]
    %v252 = vld [vmem:[%s3 + $0x150] sm:$0xff]
    %v253 = vld [vmem:[%s3 + $0x158] sm:$0xff]
    %v254 = vld [vmem:[%s3 + $0x160] sm:$0xff]
    %v255 = vld [vmem:[%s3 + $0x168] sm:$0xff]
    %v256 = vld [vmem:[%s3 + $0x170] sm:$0xff]
    %v257 = vld [vmem:[%s3 + $0x178] sm:$0xff]
    %v258 = vld [vmem:[%s3 + $0x180] sm:$0xff]
    %v259 = vld [vmem:[%s3 + $0x188] sm:$0xff]
    %v260 = vld [vmem:[%s3 + $0x190] sm:$0xff]
    %v261 = vld [vmem:[%s3 + $0x198] sm:$0xff]
    %v262 = vld [vmem:[%s3 + $0x1a0] sm:$0xff]
    %v263 = vld [vmem:[%s3 + $0x1a8] sm:$0xff]
    %v264 = vld [vmem:[%s3 + $0x1b0] sm:$0xff]
    %v265 = vld [vmem:[%s3 + $0x1b8] sm:$0xff]
    %v266 = vld [vmem:[%s3 + $0x1c0] sm:$0xff]
    %v267 = vld [vmem:[%s3 + $0x1c8] sm:$0xff]
    %v268 = vld [vmem:[%s3 + $0x1d0] sm:$0xff]
    %v269 = vld [vmem:[%s3 + $0x1d8] sm:$0xff]
    %v270 = vld [vmem:[%s3 + $0x1e0] sm:$0xff]
    %v271 = vld [vmem:[%s3 + $0x1e8] sm:$0xff]
    %v272 = vld [vmem:[%s3 + $0x1f0] sm:$0xff]
    %v273 = vld [vmem:[%s3 + $0x1f8] sm:$0xff]
    %v274 = vld [vmem:[%s3 + $0x200] sm:$0xff]
    %v275 = vld [vmem:[%s3 + $0x208] sm:$0xff]
    %v276 = vld [vmem:[%s3 + $0x210] sm:$0xff]
    %v277 = vld [vmem:[%s3 + $0x218] sm:$0xff]
    %v278 = vld [vmem:[%s3 + $0x220] sm:$0xff]
    %v279 = vld [vmem:[%s3 + $0x228] sm:$0xff]
    %v280 = vld [vmem:[%s3 + $0x230] sm:$0xff]
    %v281 = vld [vmem:[%s3 + $0x238] sm:$0xff]
    %v282 = vld [vmem:[%s3 + $0x240] sm:$0xff]
    %v283 = vld [vmem:[%s3 + $0x248] sm:$0xff]
    %v284 = vld [vmem:[%s3 + $0x250] sm:$0xff]
    %v285 = vld [vmem:[%s3 + $0x258] sm:$0xff]
    %v286 = vld [vmem:[%s3 + $0x260] sm:$0xff]
    %v287 = vld [vmem:[%s3 + $0x268] sm:$0xff]
    %v288 = vld [vmem:[%s3 + $0x270] sm:$0xff]
    %v289 = vld [vmem:[%s3 + $0x278] sm:$0xff]
    %v290 = vld [vmem:[%s3 + $0x280] sm:$0xff]
    %v291 = vld [vmem:[%s3 + $0x288] sm:$0xff]
    %v292 = vld [vmem:[%s3 + $0x290] sm:$0xff]
    %v293 = vld [vmem:[%s3 + $0x298] sm:$0xff]
    %v294 = vld [vmem:[%s3 + $0x2a0] sm:$0xff]
    %v295 = vld [vmem:[%s3 + $0x2a8] sm:$0xff]
    %v296 = vld [vmem:[%s3 + $0x2b0] sm:$0xff]
    %v297 = vld [vmem:[%s3 + $0x2b8] sm:$0xff]
    %v298 = vld [vmem:[%s3 + $0x2c0] sm:$0xff]
    %v299 = vld [vmem:[%s3 + $0x2c8] sm:$0xff]
    %v300 = vld [vmem:[%s3 + $0x2d0] sm:$0xff]
    %v301 = vld [vmem:[%s3 + $0x2d8] sm:$0xff]
    %v302 = vld [vmem:[%s3 + $0x2e0] sm:$0xff]
    %v303 = vld [vmem:[%s3 + $0x2e8] sm:$0xff]
    %v304 = vld [vmem:[%s3 + $0x2f0] sm:$0xff]
    %v305 = vld [vmem:[%s3 + $0x2f8] sm:$0xff]
    %v306 = vld [vmem:[%s3 + $0x300] sm:$0xff]
    %v307 = vld [vmem:[%s3 + $0x308] sm:$0xff]
    %v308 = vld [vmem:[%s3 + $0x310] sm:$0xff]
    %v309 = vld [vmem:[%s3 + $0x318] sm:$0xff]
    %v310 = vld [vmem:[%s3 + $0x320] sm:$0xff]
    %v311 = vld [vmem:[%s3 + $0x328] sm:$0xff]
    %v312 = vld [vmem:[%s3 + $0x330] sm:$0xff]
    %v313 = vld [vmem:[%s3 + $0x338] sm:$0xff]
    %v314 = vld [vmem:[%s3 + $0x340] sm:$0xff]
    %v315 = vld [vmem:[%s3 + $0x348] sm:$0xff]
    %v316 = vld [vmem:[%s3 + $0x350] sm:$0xff]
    %v317 = vld [vmem:[%s3 + $0x358] sm:$0xff]
    %v318 = vld [vmem:[%s3 + $0x360] sm:$0xff]
    %v319 = vld [vmem:[%s3 + $0x368] sm:$0xff]
    %v320 = vld [vmem:[%s3 + $0x370] sm:$0xff]
    %v321 = vld [vmem:[%s3 + $0x378] sm:$0xff]
    %v322 = vld [vmem:[%s3 + $0x380] sm:$0xff]
    %v323 = vld [vmem:[%s3 + $0x388] sm:$0xff]
    %v324 = vld [vmem:[%s3 + $0x390] sm:$0xff]
    %v325 = vld [vmem:[%s3 + $0x398] sm:$0xff]
    %v326 = vld [vmem:[%s3 + $0x3a0] sm:$0xff]
    %v327 = vld [vmem:[%s3 + $0x3a8] sm:$0xff]
    %v328 = vld [vmem:[%s3 + $0x3b0] sm:$0xff]
    %v329 = vld [vmem:[%s3 + $0x3b8] sm:$0xff]
    %v330 = vld [vmem:[%s3 + $0x3c0] sm:$0xff]
    %v331 = vld [vmem:[%s3 + $0x3c8] sm:$0xff]
    %v332 = vld [vmem:[%s3 + $0x3d0] sm:$0xff]
    %v333 = vld [vmem:[%s3 + $0x3d8] sm:$0xff]
    %v334 = vld [vmem:[%s3 + $0x3e0] sm:$0xff]
    %v335 = vld [vmem:[%s3 + $0x3e8] sm:$0xff]
    %v336 = vld [vmem:[%s3 + $0x3f0] sm:$0xff]
    %v337 = vld [vmem:[%s3 + $0x3f8] sm:$0xff]
    %v338 = vld [vmem:[%s4] sm:$0x1]
    %v340 = vlaneseq
    %v341 = vshrl.u32 %v340, 7
    %v342 = vsub.s32 0, %v341
    %v343 = vrot.slane %v338, %v342
    %345 = vmatprep.subr.mxu0 0.0
    %346 = vmatpush1.msra.mxu0 %v225
    %347 = vmatprep.subr.mxu0 0.0
    %348 = vmatpush1.msra.mxu0 %v224
    %349 = vmatprep.subr.mxu0 0.0
    %350 = vmatpush1.msra.mxu0 %v223
    %351 = vmatprep.subr.mxu0 0.0
    %352 = vmatpush1.msra.mxu0 %v222
    %353 = vmatprep.subr.mxu0 0.0
    %354 = vmatpush1.msra.mxu0 %v221
    %355 = vmatprep.subr.mxu0 0.0
    %356 = vmatpush1.msra.mxu0 %v220
    %357 = vmatprep.subr.mxu0 0.0
    %358 = vmatpush1.msra.mxu0 %v219
    %359 = vmatprep.subr.mxu0 0.0
    %360 = vmatpush1.msra.mxu0 %v218
    %361 = vmatprep.subr.mxu0 0.0
    %362 = vmatpush1.msra.mxu0 %v217
    %363 = vmatprep.subr.mxu0 0.0
    %364 = vmatpush1.msra.mxu0 %v216
    %365 = vmatprep.subr.mxu0 0.0
    %366 = vmatpush1.msra.mxu0 %v215
    %367 = vmatprep.subr.mxu0 0.0
    %368 = vmatpush1.msra.mxu0 %v214
    %369 = vmatprep.subr.mxu0 0.0
    %370 = vmatpush1.msra.mxu0 %v213
    %371 = vmatprep.subr.mxu0 0.0
    %372 = vmatpush1.msra.mxu0 %v212
    %373 = vmatprep.subr.mxu0 0.0
    %374 = vmatpush1.msra.mxu0 %v211
    %375 = vmatprep.subr.mxu0 0.0
    %376 = vmatpush1.msra.mxu0 %v210
    %377 = vmatprep.subr.mxu0 0.0
    %378 = vmatpush2.msra.mxu0 %v241
    %379 = vmatprep.subr.mxu0 0.0
    %380 = vmatpush2.msra.mxu0 %v240
    %381 = vmatprep.subr.mxu0 0.0
    %382 = vmatpush2.msra.mxu0 %v239
    %383 = vmatprep.subr.mxu0 0.0
    %384 = vmatpush2.msra.mxu0 %v238
    %385 = vmatprep.subr.mxu0 0.0
    %386 = vmatpush2.msra.mxu0 %v237
    %387 = vmatprep.subr.mxu0 0.0
    %388 = vmatpush2.msra.mxu0 %v236
    %389 = vmatprep.subr.mxu0 0.0
    %390 = vmatpush2.msra.mxu0 %v235
    %391 = vmatprep.subr.mxu0 0.0
    %392 = vmatpush2.msra.mxu0 %v234
    %393 = vmatprep.subr.mxu0 0.0
    %394 = vmatpush2.msra.mxu0 %v233
    %395 = vmatprep.subr.mxu0 0.0
    %396 = vmatpush2.msra.mxu0 %v232
    %397 = vmatprep.subr.mxu0 0.0
    %398 = vmatpush2.msra.mxu0 %v231
    %399 = vmatprep.subr.mxu0 0.0
    %400 = vmatpush2.msra.mxu0 %v230
    %401 = vmatprep.subr.mxu0 0.0
    %402 = vmatpush2.msra.mxu0 %v229
    %403 = vmatprep.subr.mxu0 0.0
    %404 = vmatpush2.msra.mxu0 %v228
    %405 = vmatprep.subr.mxu0 0.0
    %406 = vmatpush2.msra.mxu0 %v227
    %407 = vmatprep.subr.mxu0 0.0
    %408 = vmatpush2.msra.mxu0 %v226
    %409 = vmatprep.mubr.f32.mxu0 %v195
    %410 = vmatmul.mubr.f32.gmra.mxu0 %v194
    %v411 = vpop.f32.mrf.mxu0
    %v412 = vadd.f32 %v343, %v411
    %v413 = vpop.f32.mrf.mxu0
    %414 = vmatprep.mubr.f32.mxu0 %v203
    %415 = vmatmul.mubr.f32.gmra.mxu0 %v202
    %v416 = vpop.f32.mrf.mxu0
    %v417 = vadd.f32 %v343, %v416
    %v418 = vpop.f32.mrf.mxu0
    %419 = vdwg.mxu0
    %420 = vmatprep.subr.mxu0 0.0
    %421 = vmatpush1.msra.mxu0 %v257
    %422 = vmatprep.subr.mxu0 0.0
    %423 = vmatpush1.msra.mxu0 %v256
    %424 = vmatprep.subr.mxu0 0.0
    %425 = vmatpush1.msra.mxu0 %v255
    %426 = vmatprep.subr.mxu0 0.0
    %427 = vmatpush1.msra.mxu0 %v254
    %428 = vmatprep.subr.mxu0 0.0
    %429 = vmatpush1.msra.mxu0 %v253
    %430 = vmatprep.subr.mxu0 0.0
    %431 = vmatpush1.msra.mxu0 %v252
    %432 = vmatprep.subr.mxu0 0.0
    %433 = vmatpush1.msra.mxu0 %v251
    %434 = vmatprep.subr.mxu0 0.0
    %435 = vmatpush1.msra.mxu0 %v250
    %436 = vmatprep.subr.mxu0 0.0
    %437 = vmatpush1.msra.mxu0 %v249
    %438 = vmatprep.subr.mxu0 0.0
    %439 = vmatpush1.msra.mxu0 %v248
    %440 = vmatprep.subr.mxu0 0.0
    %441 = vmatpush1.msra.mxu0 %v247
    %442 = vmatprep.subr.mxu0 0.0
    %443 = vmatpush1.msra.mxu0 %v246
    %444 = vmatprep.subr.mxu0 0.0
    %445 = vmatpush1.msra.mxu0 %v245
    %446 = vmatprep.subr.mxu0 0.0
    %447 = vmatpush1.msra.mxu0 %v244
    %448 = vmatprep.subr.mxu0 0.0
    %449 = vmatpush1.msra.mxu0 %v243
    %450 = vmatprep.subr.mxu0 0.0
    %451 = vmatpush1.msra.mxu0 %v242
    %452 = vmatprep.subr.mxu0 0.0
    %453 = vmatpush2.msra.mxu0 %v273
    %454 = vmatprep.subr.mxu0 0.0
    %455 = vmatpush2.msra.mxu0 %v272
    %456 = vmatprep.subr.mxu0 0.0
    %457 = vmatpush2.msra.mxu0 %v271
    %458 = vmatprep.subr.mxu0 0.0
    %459 = vmatpush2.msra.mxu0 %v270
    %460 = vmatprep.subr.mxu0 0.0
    %461 = vmatpush2.msra.mxu0 %v269
    %462 = vmatprep.subr.mxu0 0.0
    %463 = vmatpush2.msra.mxu0 %v268
    %464 = vmatprep.subr.mxu0 0.0
    %465 = vmatpush2.msra.mxu0 %v267
    %466 = vmatprep.subr.mxu0 0.0
    %467 = vmatpush2.msra.mxu0 %v266
    %468 = vmatprep.subr.mxu0 0.0
    %469 = vmatpush2.msra.mxu0 %v265
    %470 = vmatprep.subr.mxu0 0.0
    %471 = vmatpush2.msra.mxu0 %v264
    %472 = vmatprep.subr.mxu0 0.0
    %473 = vmatpush2.msra.mxu0 %v263
    %474 = vmatprep.subr.mxu0 0.0
    %475 = vmatpush2.msra.mxu0 %v262
    %476 = vmatprep.subr.mxu0 0.0
    %477 = vmatpush2.msra.mxu0 %v261
    %478 = vmatprep.subr.mxu0 0.0
    %479 = vmatpush2.msra.mxu0 %v260
    %480 = vmatprep.subr.mxu0 0.0
    %481 = vmatpush2.msra.mxu0 %v259
    %482 = vmatprep.subr.mxu0 0.0
    %483 = vmatpush2.msra.mxu0 %v258
    %484 = vmatprep.mubr.f32.mxu0 %v197
    %485 = vmatmul.mubr.f32.gmra.mxu0 %v196
    %v486 = vpop.f32.mrf.mxu0
    %v487 = vadd.f32 %v412, %v486
    %v488 = vpop.f32.mrf.mxu0
    %489 = vmatprep.mubr.f32.mxu0 %v205
    %490 = vmatmul.mubr.f32.gmra.mxu0 %v204
    %v491 = vpop.f32.mrf.mxu0
    %v492 = vadd.f32 %v417, %v491
    %v493 = vpop.f32.mrf.mxu0
    %494 = vdwg.mxu0
    %495 = vmatprep.subr.mxu0 0.0
    %496 = vmatpush1.msra.mxu0 %v289
    %497 = vmatprep.subr.mxu0 0.0
    %498 = vmatpush1.msra.mxu0 %v288
    %499 = vmatprep.subr.mxu0 0.0
    %500 = vmatpush1.msra.mxu0 %v287
    %501 = vmatprep.subr.mxu0 0.0
    %502 = vmatpush1.msra.mxu0 %v286
    %503 = vmatprep.subr.mxu0 0.0
    %504 = vmatpush1.msra.mxu0 %v285
    %505 = vmatprep.subr.mxu0 0.0
    %506 = vmatpush1.msra.mxu0 %v284
    %507 = vmatprep.subr.mxu0 0.0
    %508 = vmatpush1.msra.mxu0 %v283
    %509 = vmatprep.subr.mxu0 0.0
    %510 = vmatpush1.msra.mxu0 %v282
    %511 = vmatprep.subr.mxu0 0.0
    %512 = vmatpush1.msra.mxu0 %v281
    %513 = vmatprep.subr.mxu0 0.0
    %514 = vmatpush1.msra.mxu0 %v280
    %515 = vmatprep.subr.mxu0 0.0
    %516 = vmatpush1.msra.mxu0 %v279
    %517 = vmatprep.subr.mxu0 0.0
    %518 = vmatpush1.msra.mxu0 %v278
    %519 = vmatprep.subr.mxu0 0.0
    %520 = vmatpush1.msra.mxu0 %v277
    %521 = vmatprep.subr.mxu0 0.0
    %522 = vmatpush1.msra.mxu0 %v276
    %523 = vmatprep.subr.mxu0 0.0
    %524 = vmatpush1.msra.mxu0 %v275
    %525 = vmatprep.subr.mxu0 0.0
    %526 = vmatpush1.msra.mxu0 %v274
    %527 = vmatprep.subr.mxu0 0.0
    %528 = vmatpush2.msra.mxu0 %v305
    %529 = vmatprep.subr.mxu0 0.0
    %530 = vmatpush2.msra.mxu0 %v304
    %531 = vmatprep.subr.mxu0 0.0
    %532 = vmatpush2.msra.mxu0 %v303
    %533 = vmatprep.subr.mxu0 0.0
    %534 = vmatpush2.msra.mxu0 %v302
    %535 = vmatprep.subr.mxu0 0.0
    %536 = vmatpush2.msra.mxu0 %v301
    %537 = vmatprep.subr.mxu0 0.0
    %538 = vmatpush2.msra.mxu0 %v300
    %539 = vmatprep.subr.mxu0 0.0
    %540 = vmatpush2.msra.mxu0 %v299
    %541 = vmatprep.subr.mxu0 0.0
    %542 = vmatpush2.msra.mxu0 %v298
    %543 = vmatprep.subr.mxu0 0.0
    %544 = vmatpush2.msra.mxu0 %v297
    %545 = vmatprep.subr.mxu0 0.0
    %546 = vmatpush2.msra.mxu0 %v296
    %547 = vmatprep.subr.mxu0 0.0
    %548 = vmatpush2.msra.mxu0 %v295
    %549 = vmatprep.subr.mxu0 0.0
    %550 = vmatpush2.msra.mxu0 %v294
    %551 = vmatprep.subr.mxu0 0.0
    %552 = vmatpush2.msra.mxu0 %v293
    %553 = vmatprep.subr.mxu0 0.0
    %554 = vmatpush2.msra.mxu0 %v292
    %555 = vmatprep.subr.mxu0 0.0
    %556 = vmatpush2.msra.mxu0 %v291
    %557 = vmatprep.subr.mxu0 0.0
    %558 = vmatpush2.msra.mxu0 %v290
    %559 = vmatprep.mubr.f32.mxu0 %v199
    %560 = vmatmul.mubr.f32.gmra.mxu0 %v198
    %v561 = vpop.f32.mrf.mxu0
    %v562 = vadd.f32 %v487, %v561
    %v563 = vpop.f32.mrf.mxu0
    %564 = vmatprep.mubr.f32.mxu0 %v207
    %565 = vmatmul.mubr.f32.gmra.mxu0 %v206
    %v566 = vpop.f32.mrf.mxu0
    %v567 = vadd.f32 %v492, %v566
    %v568 = vpop.f32.mrf.mxu0
    %569 = vdwg.mxu0
    %570 = vmatprep.subr.mxu0 0.0
    %571 = vmatpush1.msra.mxu0 %v321
    %572 = vmatprep.subr.mxu0 0.0
    %573 = vmatpush1.msra.mxu0 %v320
    %574 = vmatprep.subr.mxu0 0.0
    %575 = vmatpush1.msra.mxu0 %v319
    %576 = vmatprep.subr.mxu0 0.0
    %577 = vmatpush1.msra.mxu0 %v318
    %578 = vmatprep.subr.mxu0 0.0
    %579 = vmatpush1.msra.mxu0 %v317
    %580 = vmatprep.subr.mxu0 0.0
    %581 = vmatpush1.msra.mxu0 %v316
    %582 = vmatprep.subr.mxu0 0.0
    %583 = vmatpush1.msra.mxu0 %v315
    %584 = vmatprep.subr.mxu0 0.0
    %585 = vmatpush1.msra.mxu0 %v314
    %586 = vmatprep.subr.mxu0 0.0
    %587 = vmatpush1.msra.mxu0 %v313
    %588 = vmatprep.subr.mxu0 0.0
    %589 = vmatpush1.msra.mxu0 %v312
    %590 = vmatprep.subr.mxu0 0.0
    %591 = vmatpush1.msra.mxu0 %v311
    %592 = vmatprep.subr.mxu0 0.0
    %593 = vmatpush1.msra.mxu0 %v310
    %594 = vmatprep.subr.mxu0 0.0
    %595 = vmatpush1.msra.mxu0 %v309
    %596 = vmatprep.subr.mxu0 0.0
    %597 = vmatpush1.msra.mxu0 %v308
    %598 = vmatprep.subr.mxu0 0.0
    %599 = vmatpush1.msra.mxu0 %v307
    %600 = vmatprep.subr.mxu0 0.0
    %601 = vmatpush1.msra.mxu0 %v306
    %602 = vmatprep.subr.mxu0 0.0
    %603 = vmatpush2.msra.mxu0 %v337
    %604 = vmatprep.subr.mxu0 0.0
    %605 = vmatpush2.msra.mxu0 %v336
    %606 = vmatprep.subr.mxu0 0.0
    %607 = vmatpush2.msra.mxu0 %v335
    %608 = vmatprep.subr.mxu0 0.0
    %609 = vmatpush2.msra.mxu0 %v334
    %610 = vmatprep.subr.mxu0 0.0
    %611 = vmatpush2.msra.mxu0 %v333
    %612 = vmatprep.subr.mxu0 0.0
    %613 = vmatpush2.msra.mxu0 %v332
    %614 = vmatprep.subr.mxu0 0.0
    %615 = vmatpush2.msra.mxu0 %v331
    %616 = vmatprep.subr.mxu0 0.0
    %617 = vmatpush2.msra.mxu0 %v330
    %618 = vmatprep.subr.mxu0 0.0
    %619 = vmatpush2.msra.mxu0 %v329
    %620 = vmatprep.subr.mxu0 0.0
    %621 = vmatpush2.msra.mxu0 %v328
    %622 = vmatprep.subr.mxu0 0.0
    %623 = vmatpush2.msra.mxu0 %v327
    %624 = vmatprep.subr.mxu0 0.0
    %625 = vmatpush2.msra.mxu0 %v326
    %626 = vmatprep.subr.mxu0 0.0
    %627 = vmatpush2.msra.mxu0 %v325
    %628 = vmatprep.subr.mxu0 0.0
    %629 = vmatpush2.msra.mxu0 %v324
    %630 = vmatprep.subr.mxu0 0.0
    %631 = vmatpush2.msra.mxu0 %v323
    %632 = vmatprep.subr.mxu0 0.0
    %633 = vmatpush2.msra.mxu0 %v322
    %634 = vmatprep.mubr.f32.mxu0 %v201
    %635 = vmatmul.mubr.f32.gmra.mxu0 %v200
    %v636 = vpop.f32.mrf.mxu0
    %v637 = vadd.f32 %v562, %v636
    %v638 = vpop.f32.mrf.mxu0
    %639 = vmatprep.mubr.f32.mxu0 %v209
    %640 = vmatmul.mubr.f32.gmra.mxu0 %v208
    %v641 = vpop.f32.mrf.mxu0
    %v642 = vadd.f32 %v567, %v641
    %v643 = vpop.f32.mrf.mxu0
    %644 = vdwg.mxu0
    %vm645 = vcmp.gt.f32.partialorder %v637, 0.0
    %vm646 = vcmp.gt.f32.partialorder %v642, 0.0
    %v647 = vsel %vm645, 1, 0
    %v648 = vsel %vm646, 1, 0
    %v649 = vcvt.s32.f32 %v647
    %v650 = vcvt.s32.f32 %v648
    %v651 = vld [vmem:[%s5] sm:$0xff]
    %v652 = vld [vmem:[%s5 + $0x8] sm:$0xff]
    %v653 = vld [vmem:[%s5 + $0x10] sm:$0xff]
    %v654 = vld [vmem:[%s5 + $0x18] sm:$0xff]
    %vm655 = vcmask 261120
    %v657 = vsel %vm655, %v649, 0
    %v660 = vsel %vm655, %v650, 0
    %662 = vmatprep.subr.mxu0 0.0
    %663 = vmatpush1.msra.mxu0 0.0
    %664 = vmatprep.subr.mxu0 0.0
    %665 = vmatpush1.msra.mxu0 0.0
    %666 = vmatprep.subr.mxu0 0.0
    %667 = vmatpush1.msra.mxu0 0.0
    %668 = vmatprep.subr.mxu0 0.0
    %669 = vmatpush1.msra.mxu0 0.0
    %670 = vmatprep.subr.mxu0 0.0
    %671 = vmatpush1.msra.mxu0 0.0
    %672 = vmatprep.subr.mxu0 0.0
    %673 = vmatpush1.msra.mxu0 0.0
    %674 = vmatprep.subr.mxu0 0.0
    %675 = vmatpush1.msra.mxu0 0.0
    %676 = vmatprep.subr.mxu0 0.0
    %677 = vmatpush1.msra.mxu0 0.0
    %678 = vmatprep.subr.mxu0 0.0
    %679 = vmatpush1.msra.mxu0 0.0
    %680 = vmatprep.subr.mxu0 0.0
    %681 = vmatpush1.msra.mxu0 0.0
    %682 = vmatprep.subr.mxu0 0.0
    %683 = vmatpush1.msra.mxu0 0.0
    %684 = vmatprep.subr.mxu0 0.0
    %685 = vmatpush1.msra.mxu0 0.0
    %686 = vmatprep.subr.mxu0 0.0
    %687 = vmatpush1.msra.mxu0 %v654
    %688 = vmatprep.subr.mxu0 0.0
    %689 = vmatpush1.msra.mxu0 %v653
    %690 = vmatprep.subr.mxu0 0.0
    %691 = vmatpush1.msra.mxu0 %v652
    %692 = vmatprep.subr.mxu0 0.0
    %693 = vmatpush1.msra.mxu0 %v651
    %694 = vmatprep.subr.mxu0 0.0
    %695 = vmatpush2.msra.mxu0 0.0
    %696 = vmatprep.subr.mxu0 0.0
    %697 = vmatpush2.msra.mxu0 0.0
    %698 = vmatprep.subr.mxu0 0.0
    %699 = vmatpush2.msra.mxu0 0.0
    %700 = vmatprep.subr.mxu0 0.0
    %701 = vmatpush2.msra.mxu0 0.0
    %702 = vmatprep.subr.mxu0 0.0
    %703 = vmatpush2.msra.mxu0 0.0
    %704 = vmatprep.subr.mxu0 0.0
    %705 = vmatpush2.msra.mxu0 0.0
    %706 = vmatprep.subr.mxu0 0.0
    %707 = vmatpush2.msra.mxu0 0.0
    %708 = vmatprep.subr.mxu0 0.0
    %709 = vmatpush2.msra.mxu0 0.0
    %710 = vmatprep.subr.mxu0 0.0
    %711 = vmatpush2.msra.mxu0 0.0
    %712 = vmatprep.subr.mxu0 0.0
    %713 = vmatpush2.msra.mxu0 0.0
    %714 = vmatprep.subr.mxu0 0.0
    %715 = vmatpush2.msra.mxu0 0.0
    %716 = vmatprep.subr.mxu0 0.0
    %717 = vmatpush2.msra.mxu0 0.0
    %718 = vmatprep.subr.mxu0 0.0
    %719 = vmatpush2.msra.mxu0 0.0
    %720 = vmatprep.subr.mxu0 0.0
    %721 = vmatpush2.msra.mxu0 0.0
    %722 = vmatprep.subr.mxu0 0.0
    %723 = vmatpush2.msra.mxu0 0.0
    %724 = vmatprep.subr.mxu0 0.0
    %725 = vmatpush2.msra.mxu0 0.0
    %726 = vmatprep.mubr.f32.mxu0 0.0
    %727 = vmatmul.mubr.f32.gmra.mxu0 %v657
    %v728 = vpop.f32.mrf.mxu0
    %v729 = vadd.f32 0.0, %v728
    %v730 = vpop.f32.mrf.mxu0
    %731 = vmatprep.mubr.f32.mxu0 0.0
    %732 = vmatmul.mubr.f32.gmra.mxu0 %v660
    %v733 = vpop.f32.mrf.mxu0
    %v734 = vadd.f32 0.0, %v733
    %v735 = vpop.f32.mrf.mxu0
    %736 = vdwg.mxu0
    %v737 = vmul.f32 %v729, %v649
    %v738 = vmul.f32 %v734, %v650
    %v739 = vsel %vm655, %v737, 0.0
    %740 = vadd.xlane.f32.xlu0 %v739
    %v741 = vpop.xlane.xlu0 %740
    %v742 = vsel %vm655, %v738, 0.0
    %743 = vadd.xlane.f32.xlu0 %v742
    %v744 = vpop.xlane.xlu0 %743
    %v745 = vrsqrt.pop %v741
    %v746 = vmul.f32 %v741, %v745
    %vm747 = vcmp.eq.f32.partialorder %v741, inf
    %v748 = vsel %vm747, %v741, %v746
    %vm749 = vcmp.eq.f32.partialorder %v741, 0.0
    %v750 = vand.u32 %v741, 2147483648
    %v751 = vsel %vm749, %v750, %v748
    %v752 = vrsqrt.pop %v744
    %v753 = vmul.f32 %v744, %v752
    %vm754 = vcmp.eq.f32.partialorder %v744, inf
    %v755 = vsel %vm754, %v744, %v753
    %vm756 = vcmp.eq.f32.partialorder %v744, 0.0
    %v757 = vand.u32 %v744, 2147483648
    %v758 = vsel %vm756, %v757, %v755
    %v759 = vsub.f32 %v751, 1.0
    %v760 = vsub.f32 %v758, 1.0
    %v761 = vmul.f32 %v759, %v759
    %v762 = vmul.f32 %v760, %v760
    %s763 = sadd.s32 0, 0
    %s764 = smul.u32 %s763, 16
    %v765 = vlaneseq
    %v766 = vshrl.u32 %v765, 7
    %v767 = vadd.s32 %v766, 8
    %v768 = vstv %s764
    %v769 = vadd.s32 %v768, %v766
    %v770 = vadd.s32 %v768, %v767
    %vm771 = vcmp.lt.s32.totalorder %v769, 2
    %vm772 = vcmp.lt.s32.totalorder %v770, 2
    %v773 = vsel %vm771, %v761, 0.0
    %v774 = vsel %vm772, %v762, 0.0
    %v775 = vld [vmem:[#allocation2] sm:$0x1]
    %vm776 = vcmask 7168
    %v777 = vsel %vm776, %v773, 0.0
    %v778 = vsel %vm776, %v774, 0.0
    %v779 = vadd.f32 %v777, %v778
    %780 = vadd.xlane.f32.xlu0 %v779
    %v781 = vpop.xlane.xlu0 %780
    %v782 = vrot.slane %v781, 4
    %v783 = vadd.f32 %v781, %v782
    %v784 = vrot.slane %v783, 2
    %v785 = vadd.f32 %v783, %v784
    %v786 = vrot.slane %v785, 1
    %v787 = vadd.f32 %v785, %v786
    %s788 = vtos %v787
    %v789 = vstv %s788
    %v790 = vadd.f32 %v775, %v789
    %vm791 = vcmask 0
    %792 = vst.msk [vmem:[#allocation2] sm:$0x1] %vm791, %v790
    // Predicated region
    $region30: #{tpu_custom_call.1} parent=1 // pred_check
      %p793 = pneg %p96
    $region31: #{tpu_custom_call.1} parent=1 // pred_check_branch
      %795 = sbr.rel (%p793) target = $region33
    $region32: #{tpu_custom_call.1} parent=1 // pred_region
      %v796 = vld [vmem:[#allocation2] sm:$0x1]
      %797 = vst.msk [vmem:[#allocation3] sm:$0x1] %vm791, %v796
    $region33: #{tpu_custom_call.1} parent=1 // pred_fallthru
      _
    // Predicated region
    $region34: #{tpu_custom_call.1} parent=1 // pred_check
      _
    $region35: #{tpu_custom_call.1} parent=1 // pred_check_branch
      %799 = sbr.rel (0) target = $region37
    $region36: #{tpu_custom_call.1} parent=1 // pred_region
      %s801 = ssub.s32 16, 16
      %802 = vsyncadd [#allocation4], %s801
      %s804 = sshll.u32 [#allocation3], 4
      %s805 = int_to_ptr.vmem [resolvable:$true] %s804
      %807 = dma.vmem_to_hbm [thread:$0]  %s805, 16, %s6, [#allocation4]
    $region37: #{tpu_custom_call.1} parent=1 // pred_fallthru
      _
    // Predicated region
    $region38: #{tpu_custom_call.1} parent=1 // pred_check
      _
    $region39: #{tpu_custom_call.1} parent=1 // pred_check_branch
      %809 = sbr.rel (0) target = $region41
    $region40: #{tpu_custom_call.1} parent=1 // pred_region
      %810 = dma.done [#allocation4], 16
    $region41: #{tpu_custom_call.1} parent=1 // pred_fallthru
      _
    %811 = vsyncpa [#allocation4], 1

</llo_original>
